<compile_context>
chip_gen: v6e
topology: v6e:2x2x1
jax: 0.10.0
libtpu: 0.0.40
codegen_flags: <defaults>
</compile_context>

<pallas_src>
import jax
import jax.numpy as jnp
from jax.experimental import pallas as pl
from jax.experimental.pallas import tpu as pltpu

INPUT_DIM = 6
IN_PAD = 8          # feature dim zero-padded to one full sublane group
HIDDEN_DIM = 16
OUTPUT_DIM = 1


def _round_up(n, m):
    return ((n + m - 1) // m) * m


def mlp_kernel(xT_ref, w1_ref, b1_ref, w2_ref, b2_ref, o_ref):
    # xT_ref: [IN_PAD, TB]       feature-major tile (features on sublanes, batch on lanes)
    # w1_ref: [HIDDEN, IN_PAD]   VMEM-resident (PyTorch fc1.weight, K zero-padded 6->8)
    # b1_ref: [HIDDEN, 1]        VMEM-resident column (broadcast along lanes)
    # w2_ref: [OUTPUT, HIDDEN]   VMEM-resident (PyTorch fc2.weight, used directly)
    # b2_ref: [1]                scalar in SMEM
    # o_ref : [1, TB]            lane-dense output row (batch on lanes)

    # fc1 on the MXU with batch as the N dimension; f32 accumulation.
    hT = jnp.dot(w1_ref[...], xT_ref[...],
                 preferred_element_type=jnp.float32)          # [HIDDEN, TB]
    # Bias + ReLU on full 128-lane vregs.
    hT = jnp.maximum(hT + b1_ref[...], 0.0)
    # TODO(synk): nn.Dropout(0.5) is identity in eval/inference mode; no RNG mask applied.
    # fc2: [1,16] @ [16,TB] -> [1,TB]; already lane-dense, no transpose needed.
    y = jnp.dot(w2_ref[...], hT,
                preferred_element_type=jnp.float32)           # [1, TB]
    y = y + b2_ref[0]
    # Exact sigmoid (exp runs on the EUP; saturates cleanly, no NaN path).
    o_ref[...] = 1.0 / (1.0 + jnp.exp(-y))


def recommendation_model_forward(x, w1, b1, w2, b2, *, block_batch=16384):
    """x: [B, INPUT_DIM] f32 (natural PyTorch layout).
    w1: [HIDDEN, INPUT], b1: [HIDDEN], w2: [OUTPUT, HIDDEN], b2: [OUTPUT]
    (PyTorch nn.Linear layouts).  Returns [B, OUTPUT] = sigmoid(fc2(relu(fc1(x))))."""
    assert block_batch % 128 == 0, "block_batch must be a multiple of 128 lanes"
    B = x.shape[0]
    x = x.astype(jnp.float32)

    # Tile size: multiple of 128 lanes, >= 2 tiles when B allows (v7x megacore),
    # capped at block_batch (amortizes the ~0.35 us/step overhead for large B).
    half = _round_up(pl.cdiv(B, 2), 128)
    tb = min(block_batch, max(128, half))
    bp = _round_up(B, tb)
    num_tiles = bp // tb

    # One-time layout plumbing: zero-pad x to [bp, IN_PAD] and make it
    # feature-major [IN_PAD, bp] so the kernel's x blocks are lane-dense.
    # (Padded batch rows produce garbage outputs that are sliced off below;
    #  padded feature columns meet zero weight columns, so fc1 is exact.)
    xT = jnp.pad(x, ((0, bp - B), (0, IN_PAD - INPUT_DIM))).T        # [IN_PAD, bp]

    # Tiny one-time parameter relayouts (kernel-friendly shapes).
    w1_pad = jnp.pad(w1.astype(jnp.float32),
                     ((0, 0), (0, IN_PAD - INPUT_DIM)))              # [HIDDEN, IN_PAD]
    b1_col = b1.reshape(HIDDEN_DIM, 1).astype(jnp.float32)           # [HIDDEN, 1]
    w2_row = w2.reshape(OUTPUT_DIM, HIDDEN_DIM).astype(jnp.float32)  # [1, HIDDEN]
    b2_s = b2.reshape(OUTPUT_DIM).astype(jnp.float32)                # [1] -> SMEM

    out_slab = pl.pallas_call(
        mlp_kernel,
        out_shape=jax.ShapeDtypeStruct((1, bp), jnp.float32),
        grid=(num_tiles,),
        in_specs=[
            pl.BlockSpec((IN_PAD, tb), lambda i: (0, i)),             # streamed xT tile
            pl.BlockSpec((HIDDEN_DIM, IN_PAD), lambda i: (0, 0)),     # w1 resident
            pl.BlockSpec((HIDDEN_DIM, 1), lambda i: (0, 0)),          # b1 resident
            pl.BlockSpec((OUTPUT_DIM, HIDDEN_DIM), lambda i: (0, 0)), # w2 resident
            pl.BlockSpec(memory_space=pltpu.MemorySpace.SMEM),        # b2 scalar
        ],
        out_specs=pl.BlockSpec((1, tb), lambda i: (0, i)),            # lane-dense row
        compiler_params=pltpu.CompilerParams(
            dimension_semantics=("parallel",)),
    )(xT, w1_pad, b1_col, w2_row, b2_s)

    # [1, bp] slab -> [B, 1]
    return out_slab[0, :B].reshape(B, OUTPUT_DIM)


def _init_params(key):
    """Deterministic init matching PyTorch Linear shapes (uniform +-1/sqrt(fan_in))."""
    k1, k2, k3, k4 = jax.random.split(key, 4)
    bound1 = 1.0 / jnp.sqrt(INPUT_DIM)
    bound2 = 1.0 / jnp.sqrt(HIDDEN_DIM)
    w1 = jax.random.uniform(k1, (HIDDEN_DIM, INPUT_DIM), jnp.float32, -bound1, bound1)
    b1 = jax.random.uniform(k2, (HIDDEN_DIM,), jnp.float32, -bound1, bound1)
    w2 = jax.random.uniform(k3, (OUTPUT_DIM, HIDDEN_DIM), jnp.float32, -bound2, bound2)
    b2 = jax.random.uniform(k4, (OUTPUT_DIM,), jnp.float32, -bound2, bound2)
    return w1, b1, w2, b2


def _reference_forward(x, w1, b1, w2, b2):
    h = jnp.maximum(x @ w1.T + b1, 0.0)
    return 1.0 / (1.0 + jnp.exp(-(h @ w2.T + b2)))


if __name__ == "__main__":
    key = jax.random.PRNGKey(0)
    kx, kp = jax.random.split(key)
    w1, b1, w2, b2 = _init_params(kp)

    # Small demo configs exercising: single tile, the >=2-tile split (v7x path),
    # and multi-tile with tail padding/slicing.
    for batch, blk in ((8, 16384), (200, 16384), (300, 128)):
        x = jax.random.normal(jax.random.fold_in(kx, batch),
                              (batch, INPUT_DIM), jnp.float32)
        out = recommendation_model_forward(x, w1, b1, w2, b2, block_batch=blk)
        out = jax.block_until_ready(out)
        ref = _reference_forward(x, w1, b1, w2, b2)
        assert out.shape == (batch, OUTPUT_DIM)
        assert jnp.allclose(out, ref, atol=1e-5, rtol=1e-5), (
            "max abs err = %g" % float(jnp.max(jnp.abs(out - ref))))

    print("KERNEL_OK")
</pallas_src>

<mosaic_0001>
module attributes {stable_mosaic.version = 11 : i64} {
  func.func @mlp_kernel(%arg0: i32, %arg1: memref<8x128xf32, #tpu.memory_space<vmem>>, %arg2: memref<16x8xf32, #tpu.memory_space<vmem>>, %arg3: memref<16x1xf32, #tpu.memory_space<vmem>>, %arg4: memref<1x16xf32, #tpu.memory_space<vmem>>, %arg5: memref<1xf32, #tpu.memory_space<smem>>, %arg6: memref<1x128xf32, #tpu.memory_space<vmem>>) attributes {dimension_semantics = [#tpu.dimension_semantics<parallel>], iteration_bounds = array<i64: 1>, scalar_prefetch = 0 : i64, scratch_operands = 0 : i64, tpu.core_type = #tpu.core_type<tc>, window_params = [{transform_indices = @transform_0, window_bounds = array<i64: 8, 128>}, {pipeline_mode = #tpu.pipeline_mode<synchronous>, transform_indices = @transform_1, window_bounds = array<i64: 16, 8>}, {pipeline_mode = #tpu.pipeline_mode<synchronous>, transform_indices = @transform_2, window_bounds = array<i64: 16, 1>}, {pipeline_mode = #tpu.pipeline_mode<synchronous>, transform_indices = @transform_3, window_bounds = array<i64: 1, 16>}, {transform_indices = @transform_4, window_bounds = array<i64: 1>}, {transform_indices = @transform_5, window_bounds = array<i64: 1, 128>}]} {
    %c0 = arith.constant 0 : index
    %c0_0 = arith.constant 0 : index
    %0 = vector.load %arg2[%c0, %c0_0] : memref<16x8xf32, #tpu.memory_space<vmem>>, vector<16x8xf32>
    %c0_1 = arith.constant 0 : index
    %c0_2 = arith.constant 0 : index
    %1 = vector.load %arg1[%c0_1, %c0_2] : memref<8x128xf32, #tpu.memory_space<vmem>>, vector<8x128xf32>
    %cst = arith.constant dense<0.000000e+00> : vector<16x128xf32>
    %2 = tpu.matmul %0, %1, %cst {dimension_numbers = #tpu.dot_dimension_numbers<[1], [0], [0], [1], [0, 0, 1, 1], [], []>} : vector<16x8xf32>, vector<8x128xf32>, vector<16x128xf32> -> vector<16x128xf32>
    %c0_3 = arith.constant 0 : index
    %c0_4 = arith.constant 0 : index
    %3 = vector.load %arg3[%c0_3, %c0_4] : memref<16x1xf32, #tpu.memory_space<vmem>>, vector<16x1xf32>
    %4 = vector.broadcast %3 : vector<16x1xf32> to vector<16x128xf32>
    %5 = arith.addf %2, %4 : vector<16x128xf32>
    %cst_5 = arith.constant 0.000000e+00 : f32
    %6 = vector.broadcast %cst_5 : f32 to vector<16x128xf32>
    %7 = arith.maximumf %5, %6 : vector<16x128xf32>
    %c0_6 = arith.constant 0 : index
    %c0_7 = arith.constant 0 : index
    %8 = vector.load %arg4[%c0_6, %c0_7] : memref<1x16xf32, #tpu.memory_space<vmem>>, vector<1x16xf32>
    %cst_8 = arith.constant dense<0.000000e+00> : vector<1x128xf32>
    %9 = tpu.matmul %8, %7, %cst_8 {dimension_numbers = #tpu.dot_dimension_numbers<[1], [0], [0], [1], [0, 0, 1, 1], [], []>} : vector<1x16xf32>, vector<16x128xf32>, vector<1x128xf32> -> vector<1x128xf32>
    %c0_9 = arith.constant 0 : index
    %10 = memref.load %arg5[%c0_9] : memref<1xf32, #tpu.memory_space<smem>>
    %11 = vector.broadcast %10 : f32 to vector<1x128xf32>
    %12 = arith.addf %9, %11 : vector<1x128xf32>
    %cst_10 = arith.constant 0.000000e+00 : f32
    %13 = vector.broadcast %cst_10 : f32 to vector<1x128xf32>
    %14 = arith.subf %13, %12 : vector<1x128xf32>
    %15 = math.exp %14 : vector<1x128xf32>
    %cst_11 = arith.constant 1.000000e+00 : f32
    %16 = vector.broadcast %cst_11 : f32 to vector<1x128xf32>
    %17 = arith.addf %16, %15 : vector<1x128xf32>
    %cst_12 = arith.constant 1.000000e+00 : f32
    %18 = vector.broadcast %cst_12 : f32 to vector<1x128xf32>
    %19 = arith.divf %18, %17 : vector<1x128xf32>
    %c0_13 = arith.constant 0 : index
    %c0_14 = arith.constant 0 : index
    %20 = vector.load %arg6[%c0_13, %c0_14] : memref<1x128xf32, #tpu.memory_space<vmem>>, vector<1x128xf32>
    tpu.vector_store %arg6[%c0_13, %c0_14], %19 {strides = array<i32>} : memref<1x128xf32, #tpu.memory_space<vmem>>, vector<1x128xf32>,
    return
  }
  func.func @transform_0(%arg0: i32) -> (i32, i32) {
    %c0_i32 = arith.constant 0 : i32
    %c0_i32_0 = arith.constant 0 : i32
    return %c0_i32, %arg0 : i32, i32
  }
  func.func @transform_1(%arg0: i32) -> (i32, i32) {
    %c0_i32 = arith.constant 0 : i32
    %c0_i32_0 = arith.constant 0 : i32
    %c0_i32_1 = arith.constant 0 : i32
    return %c0_i32, %c0_i32_0 : i32, i32
  }
  func.func @transform_2(%arg0: i32) -> (i32, i32) {
    %c0_i32 = arith.constant 0 : i32
    %c0_i32_0 = arith.constant 0 : i32
    %c0_i32_1 = arith.constant 0 : i32
    return %c0_i32, %c0_i32_0 : i32, i32
  }
  func.func @transform_3(%arg0: i32) -> (i32, i32) {
    %c0_i32 = arith.constant 0 : i32
    %c0_i32_0 = arith.constant 0 : i32
    %c0_i32_1 = arith.constant 0 : i32
    return %c0_i32, %c0_i32_0 : i32, i32
  }
  func.func @transform_4(%arg0: i32) -> i32 {
    %c0_i32 = arith.constant 0 : i32
    %c0_i32_0 = arith.constant 0 : i32
    return %c0_i32 : i32
  }
  func.func @transform_5(%arg0: i32) -> (i32, i32) {
    %c0_i32 = arith.constant 0 : i32
    %c0_i32_0 = arith.constant 0 : i32
    return %c0_i32, %arg0 : i32, i32
  }
}

</mosaic_0001>

<llo_original>
// kernel: tpu_custom_call.1
$region0: #{tpu_custom_call.1}
  #allocation0 [shape = 'u32[]', space=smem, size = 0x4, offset = 0x4, fixed_abs, tag = 'smem constant byte address 0x4 - core index']
  #allocation1 [shape = 'u32[144,128]{1,0:T(1,128)}', space=vmem, size = 0x12000, scoped, tag = 'internal scratch']
  #allocation2 [shape = 'f32[1]{0:T(128)S(6)}', space=smem, size = 0x200, scoped, tag = 'scoped memory for tpu_custom_call.1']
  %s0 = inlined_call_operand.vmem [shape: f32[8,128], index: 0, kind: input, shape index: {}]
  %s1 = inlined_call_operand.vmem [shape: f32[16,8], index: 1, kind: input, shape index: {}]
  %s2 = inlined_call_operand.vmem [shape: f32[16,1], index: 2, kind: input, shape index: {}]
  %s3 = inlined_call_operand.vmem [shape: f32[1,16], index: 3, kind: input, shape index: {}]
  %s4 = inlined_call_operand.<no memory space> [shape: f32[1], index: 4, kind: input, shape index: {}]
  %s5 = inlined_call_operand.hbm [shape: f32[1,128], index: 5, kind: output, shape index: {}]
  %s6 = sld [smem:[#allocation0]]
  $region30: #{tpu_custom_call.1} parent=0
    _
  %s8 = ssub.s32 1, %s6
  %s9 = scalar_select 0, %s8, %s6
  %10 = sst [smem:[#allocation2]] %s4
  $region1: #{tpu_custom_call.1} parent=0
    #allocation3 [shape = 'u8[512]{0}', space=vmem, size = 0x400, scoped, tag = 'output window, operand 0, single buffered']
    #allocation4 [shape = 's32[1]{0}', space=sflag, size = 0x4, scoped, tag = 'scoped memory for tpu_custom_call.1']
    %11 = vsyncpa [#allocation4], 0
    // Predicated region
    $region2: #{tpu_custom_call.1} parent=1 // pred_check
      _
    $region3: #{tpu_custom_call.1} parent=1 // pred_check_branch
      %13 = sbr.rel (0) target = $region5
    $region4: #{tpu_custom_call.1} parent=1 // pred_region
      _
    $region5: #{tpu_custom_call.1} parent=1 // pred_fallthru
      _
    // Predicated region
    $region6: #{tpu_custom_call.1} parent=1 // pred_check
      _
    $region7: #{tpu_custom_call.1} parent=1 // pred_check_branch
      %15 = sbr.rel (0) target = $region9
    $region8: #{tpu_custom_call.1} parent=1 // pred_region
      _
    $region9: #{tpu_custom_call.1} parent=1 // pred_fallthru
      _
    // Predicated region
    $region10: #{tpu_custom_call.1} parent=1 // pred_check
      _
    $region11: #{tpu_custom_call.1} parent=1 // pred_check_branch
      %17 = sbr.rel (0) target = $region13
    $region12: #{tpu_custom_call.1} parent=1 // pred_region
      _
    $region13: #{tpu_custom_call.1} parent=1 // pred_fallthru
      _
    // Predicated region
    $region14: #{tpu_custom_call.1} parent=1 // pred_check
      _
    $region15: #{tpu_custom_call.1} parent=1 // pred_check_branch
      %19 = sbr.rel (0) target = $region17
    $region16: #{tpu_custom_call.1} parent=1 // pred_region
      _
    $region17: #{tpu_custom_call.1} parent=1 // pred_fallthru
      _
    // Predicated region
    $region18: #{tpu_custom_call.1} parent=1 // pred_check
      _
    $region19: #{tpu_custom_call.1} parent=1 // pred_check_branch
      %21 = sbr.rel (0) target = $region21
    $region20: #{tpu_custom_call.1} parent=1 // pred_region
      _
    $region21: #{tpu_custom_call.1} parent=1 // pred_fallthru
      _
    %v22 = vld [vmem:[%s1] sm:$0xff]
    %v23 = vld [vmem:[%s1 + $0x8] sm:$0xff]
    %v24 = vld [vmem:[%s0] sm:$0xff]
    %v25 = vld [vmem:[%s2] sm:$0xff]
    %v26 = vld [vmem:[%s2 + $0x8] sm:$0xff]
    %28 = vset.pattern.permute.xlu0 0
    %29 = vperm.xlu0 %28, %v25
    %v30 = vpop.permute.xlu0 %29
    %33 = vset.pattern.permute.xlu0 0
    %34 = vperm.xlu0 %33, %v26
    %v35 = vpop.permute.xlu0 %34
    %vm37 = vcmask 64512
    %v39 = vsel %vm37, %v22, 0
    %v42 = vsel %vm37, %v23, 0
    %44 = vmatprep.subr.mxu0 0.0
    %45 = vmatpush1.msra.mxu0 0.0
    %46 = vmatprep.subr.mxu0 0.0
    %47 = vmatpush1.msra.mxu0 0.0
    %48 = vmatprep.subr.mxu0 0.0
    %49 = vmatpush1.msra.mxu0 0.0
    %50 = vmatprep.subr.mxu0 0.0
    %51 = vmatpush1.msra.mxu0 0.0
    %52 = vmatprep.subr.mxu0 0.0
    %53 = vmatpush1.msra.mxu0 0.0
    %54 = vmatprep.subr.mxu0 0.0
    %55 = vmatpush1.msra.mxu0 0.0
    %56 = vmatprep.subr.mxu0 0.0
    %57 = vmatpush1.msra.mxu0 0.0
    %58 = vmatprep.subr.mxu0 0.0
    %59 = vmatpush1.msra.mxu0 0.0
    %60 = vmatprep.subr.mxu0 0.0
    %61 = vmatpush1.msra.mxu0 0.0
    %62 = vmatprep.subr.mxu0 0.0
    %63 = vmatpush1.msra.mxu0 0.0
    %64 = vmatprep.subr.mxu0 0.0
    %65 = vmatpush1.msra.mxu0 0.0
    %66 = vmatprep.subr.mxu0 0.0
    %67 = vmatpush1.msra.mxu0 0.0
    %68 = vmatprep.subr.mxu0 0.0
    %69 = vmatpush1.msra.mxu0 0.0
    %70 = vmatprep.subr.mxu0 0.0
    %71 = vmatpush1.msra.mxu0 0.0
    %72 = vmatprep.subr.mxu0 0.0
    %73 = vmatpush1.msra.mxu0 0.0
    %74 = vmatprep.subr.mxu0 0.0
    %75 = vmatpush1.msra.mxu0 %v24
    %76 = vmatprep.subr.mxu0 0.0
    %77 = vmatpush2.msra.mxu0 0.0
    %78 = vmatprep.subr.mxu0 0.0
    %79 = vmatpush2.msra.mxu0 0.0
    %80 = vmatprep.subr.mxu0 0.0
    %81 = vmatpush2.msra.mxu0 0.0
    %82 = vmatprep.subr.mxu0 0.0
    %83 = vmatpush2.msra.mxu0 0.0
    %84 = vmatprep.subr.mxu0 0.0
    %85 = vmatpush2.msra.mxu0 0.0
    %86 = vmatprep.subr.mxu0 0.0
    %87 = vmatpush2.msra.mxu0 0.0
    %88 = vmatprep.subr.mxu0 0.0
    %89 = vmatpush2.msra.mxu0 0.0
    %90 = vmatprep.subr.mxu0 0.0
    %91 = vmatpush2.msra.mxu0 0.0
    %92 = vmatprep.subr.mxu0 0.0
    %93 = vmatpush2.msra.mxu0 0.0
    %94 = vmatprep.subr.mxu0 0.0
    %95 = vmatpush2.msra.mxu0 0.0
    %96 = vmatprep.subr.mxu0 0.0
    %97 = vmatpush2.msra.mxu0 0.0
    %98 = vmatprep.subr.mxu0 0.0
    %99 = vmatpush2.msra.mxu0 0.0
    %100 = vmatprep.subr.mxu0 0.0
    %101 = vmatpush2.msra.mxu0 0.0
    %102 = vmatprep.subr.mxu0 0.0
    %103 = vmatpush2.msra.mxu0 0.0
    %104 = vmatprep.subr.mxu0 0.0
    %105 = vmatpush2.msra.mxu0 0.0
    %106 = vmatprep.subr.mxu0 0.0
    %107 = vmatpush2.msra.mxu0 0.0
    %108 = vmatprep.mubr.f32.mxu0 0.0
    %109 = vmatmul.mubr.f32.gmra.mxu0 %v39
    %v110 = vpop.f32.mrf.mxu0
    %v111 = vadd.f32 %v30, %v110
    %v112 = vpop.f32.mrf.mxu0
    %113 = vmatprep.mubr.f32.mxu0 0.0
    %114 = vmatmul.mubr.f32.gmra.mxu0 %v42
    %v115 = vpop.f32.mrf.mxu0
    %v116 = vadd.f32 %v35, %v115
    %v117 = vpop.f32.mrf.mxu0
    %118 = vdwg.mxu0
    %v119 = vmax.f32 %v111, 0.0
    %v120 = vmax.f32 %v116, 0.0
    %v121 = vld [vmem:[%s3] sm:$0x1]
    %s122 = sld [smem:[#allocation2]]
    %v123 = vstv %s122
    %vm124 = vcmask 130048
    %v126 = vsel %vm124, %v121, 0
    %128 = vmatprep.subr.mxu0 0.0
    %129 = vmatpush1.msra.mxu0 0.0
    %130 = vmatprep.subr.mxu0 0.0
    %131 = vmatpush1.msra.mxu0 0.0
    %132 = vmatprep.subr.mxu0 0.0
    %133 = vmatpush1.msra.mxu0 0.0
    %134 = vmatprep.subr.mxu0 0.0
    %135 = vmatpush1.msra.mxu0 0.0
    %136 = vmatprep.subr.mxu0 0.0
    %137 = vmatpush1.msra.mxu0 0.0
    %138 = vmatprep.subr.mxu0 0.0
    %139 = vmatpush1.msra.mxu0 0.0
    %140 = vmatprep.subr.mxu0 0.0
    %141 = vmatpush1.msra.mxu0 0.0
    %142 = vmatprep.subr.mxu0 0.0
    %143 = vmatpush1.msra.mxu0 0.0
    %144 = vmatprep.subr.mxu0 0.0
    %145 = vmatpush1.msra.mxu0 0.0
    %146 = vmatprep.subr.mxu0 0.0
    %147 = vmatpush1.msra.mxu0 0.0
    %148 = vmatprep.subr.mxu0 0.0
    %149 = vmatpush1.msra.mxu0 0.0
    %150 = vmatprep.subr.mxu0 0.0
    %151 = vmatpush1.msra.mxu0 0.0
    %152 = vmatprep.subr.mxu0 0.0
    %153 = vmatpush1.msra.mxu0 0.0
    %154 = vmatprep.subr.mxu0 0.0
    %155 = vmatpush1.msra.mxu0 0.0
    %156 = vmatprep.subr.mxu0 0.0
    %157 = vmatpush1.msra.mxu0 %v120
    %158 = vmatprep.subr.mxu0 0.0
    %159 = vmatpush1.msra.mxu0 %v119
    %160 = vmatprep.subr.mxu0 0.0
    %161 = vmatpush2.msra.mxu0 0.0
    %162 = vmatprep.subr.mxu0 0.0
    %163 = vmatpush2.msra.mxu0 0.0
    %164 = vmatprep.subr.mxu0 0.0
    %165 = vmatpush2.msra.mxu0 0.0
    %166 = vmatprep.subr.mxu0 0.0
    %167 = vmatpush2.msra.mxu0 0.0
    %168 = vmatprep.subr.mxu0 0.0
    %169 = vmatpush2.msra.mxu0 0.0
    %170 = vmatprep.subr.mxu0 0.0
    %171 = vmatpush2.msra.mxu0 0.0
    %172 = vmatprep.subr.mxu0 0.0
    %173 = vmatpush2.msra.mxu0 0.0
    %174 = vmatprep.subr.mxu0 0.0
    %175 = vmatpush2.msra.mxu0 0.0
    %176 = vmatprep.subr.mxu0 0.0
    %177 = vmatpush2.msra.mxu0 0.0
    %178 = vmatprep.subr.mxu0 0.0
    %179 = vmatpush2.msra.mxu0 0.0
    %180 = vmatprep.subr.mxu0 0.0
    %181 = vmatpush2.msra.mxu0 0.0
    %182 = vmatprep.subr.mxu0 0.0
    %183 = vmatpush2.msra.mxu0 0.0
    %184 = vmatprep.subr.mxu0 0.0
    %185 = vmatpush2.msra.mxu0 0.0
    %186 = vmatprep.subr.mxu0 0.0
    %187 = vmatpush2.msra.mxu0 0.0
    %188 = vmatprep.subr.mxu0 0.0
    %189 = vmatpush2.msra.mxu0 0.0
    %190 = vmatprep.subr.mxu0 0.0
    %191 = vmatpush2.msra.mxu0 0.0
    %192 = vmatprep.mubr.f32.mxu0 0.0
    %193 = vmatmul.mubr.f32.gmra.mxu0 %v126
    %v194 = vpop.f32.mrf.mxu0
    %v195 = vadd.f32 %v123, %v194
    %v196 = vpop.f32.mrf.mxu0
    %197 = vdwg.mxu0
    %v198 = vsub.f32 0.0, %v195
    %v199 = vmul.f32 %v198, 1.442695
    %v200 = vpow.pop %v199
    %v201 = vadd.f32 %v200, 1.0
    %v202 = vrcp.pop %v201
    %v203 = vmul.f32 1.0, %v202
    %204 = vst [vmem:[#allocation3] sm:$0x1] %v203
    // Predicated region
    $region22: #{tpu_custom_call.1} parent=1 // pred_check
      _
    $region23: #{tpu_custom_call.1} parent=1 // pred_check_branch
      %206 = sbr.rel (0) target = $region25
    $region24: #{tpu_custom_call.1} parent=1 // pred_region
      %s208 = ssub.s32 16, 16
      %209 = vsyncadd [#allocation4], %s208
      %s211 = sshll.u32 [#allocation3], 4
      %s212 = int_to_ptr.vmem [resolvable:$true] %s211
      %214 = dma.vmem_to_hbm [thread:$0]  %s212, 16, %s5, [#allocation4]
    $region25: #{tpu_custom_call.1} parent=1 // pred_fallthru
      _
    // Predicated region
    $region26: #{tpu_custom_call.1} parent=1 // pred_check
      _
    $region27: #{tpu_custom_call.1} parent=1 // pred_check_branch
      %216 = sbr.rel (0) target = $region29
    $region28: #{tpu_custom_call.1} parent=1 // pred_region
      %217 = dma.done [#allocation4], 16
    $region29: #{tpu_custom_call.1} parent=1 // pred_fallthru
      _
    %218 = vsyncpa [#allocation4], 1

</llo_original>
